<compile_context>
chip_gen: v5e
topology: v5e:2x2
jax: 0.10.0
libtpu: 0.0.40
codegen_flags: <defaults>
</compile_context>

<pallas_src>
import functools
import math

import jax
import jax.numpy as jnp
from jax.experimental import pallas as pl
from jax.experimental.pallas import tpu as pltpu


# ---------------------------------------------------------------------------
# kernel
# ---------------------------------------------------------------------------
def _self_attention_kernel(n_heads, s_pad, mm_dtype,
                           x_ref, wq_ref, bq_ref, wk_ref, bk_ref,
                           wv_ref, bv_ref, wo_ref, bo_ref,
                           out_ref, att_ref):
    x = x_ref[0]                                   # (S, E) float32
    S, E = x.shape
    H = n_heads

    # head-batched Q/K/V projections: (H,S,E) x (H,E,Dh) -> (H,S,Dh)
    xb = jnp.broadcast_to(x.astype(mm_dtype), (H, S, E))
    q = jnp.einsum('hse,hed->hsd', xb, wq_ref[...],
                   preferred_element_type=jnp.float32) + bq_ref[...]
    k = jnp.einsum('hse,hed->hsd', xb, wk_ref[...],
                   preferred_element_type=jnp.float32) + bk_ref[...]
    v = jnp.einsum('hse,hed->hsd', xb, wv_ref[...],
                   preferred_element_type=jnp.float32) + bv_ref[...]

    # attention scores (1/sqrt(Dh) already folded into Wq/bq): (H, S, S)
    s = jnp.einsum('hqd,hkd->hqk', q.astype(mm_dtype), k.astype(mm_dtype),
                   preferred_element_type=jnp.float32)

    # pad the key axis to a lane-dense width so the attention store is unmasked
    if s_pad > S:
        neg = jnp.full((H, S, s_pad - S), -1e30, dtype=jnp.float32)
        s = jnp.concatenate([s, neg], axis=-1)     # (H, S, s_pad)

    # softmax in f32; padded columns exp to exactly 0
    m = jnp.max(s, axis=-1, keepdims=True)
    e = jnp.exp(s - m)
    l = jnp.sum(e, axis=-1, keepdims=True)
    p = e * pl.reciprocal(l, approx=True)          # (H, S, s_pad) f32
    att_ref[0] = p                                 # lane-dense (128-wide) store

    p_real = p[:, :, :S]                           # contiguous slice from lane 0
    ctx = jnp.einsum('hqk,hkd->hqd', p_real.astype(mm_dtype), v.astype(mm_dtype),
                     preferred_element_type=jnp.float32)       # (H, S, Dh)

    # per-head output projection, summed over heads == concat-heads @ Wo
    o_h = jnp.einsum('hsd,hde->hse', ctx.astype(mm_dtype), wo_ref[...],
                     preferred_element_type=jnp.float32)       # (H, S, E)
    out_ref[0] = jnp.sum(o_h, axis=0) + bo_ref[...]


# ---------------------------------------------------------------------------
# parameter prep (offline): head-major layout, scale folding, bf16 weights
# ---------------------------------------------------------------------------
def prepare_params(p, n_heads, mxu_dtype=jnp.bfloat16):
    """Weights stored as (in, out); y = x @ w + b (== torch x @ W.T + b)."""
    E = p['wq'].shape[0]
    H = n_heads
    Dh = E // H
    scale = 1.0 / math.sqrt(Dh)

    def w_heads(w):                    # (E, E) -> (H, E, Dh)
        return jnp.transpose(w.reshape(E, H, Dh), (1, 0, 2))

    def b_heads(b):                    # (E,) -> (H, 1, Dh)
        return b.reshape(H, 1, Dh)

    return {
        'wq': (w_heads(p['wq']) * scale).astype(mxu_dtype),
        'bq': (b_heads(p['bq']) * scale).astype(jnp.float32),
        'wk': w_heads(p['wk']).astype(mxu_dtype),
        'bk': b_heads(p['bk']).astype(jnp.float32),
        'wv': w_heads(p['wv']).astype(mxu_dtype),
        'bv': b_heads(p['bv']).astype(jnp.float32),
        'wo': p['wo'].reshape(H, Dh, E).astype(mxu_dtype),   # (H, Dh, E)
        'bo': p['bo'].reshape(1, E).astype(jnp.float32),
    }


# ---------------------------------------------------------------------------
# pallas_call wrapper
# ---------------------------------------------------------------------------
def self_attention_forward(x, prepared, n_heads, mxu_dtype=jnp.bfloat16):
    B, S, E = x.shape
    H = n_heads
    Dh = E // H
    S_pad = ((S + 127) // 128) * 128            # lane-dense attention width

    kernel = functools.partial(_self_attention_kernel, H, S_pad, mxu_dtype)

    def rep(shape):                             # weight resident across grid
        return pl.BlockSpec(shape, lambda b: (0,) * len(shape))

    out, att_p = pl.pallas_call(
        kernel,
        out_shape=(jax.ShapeDtypeStruct((B, S, E), jnp.float32),
                   jax.ShapeDtypeStruct((B, H, S, S_pad), jnp.float32)),
        grid=(B,),
        in_specs=[
            pl.BlockSpec((1, S, E), lambda b: (b, 0, 0)),
            rep((H, E, Dh)), rep((H, 1, Dh)),          # Wq, bq (pre-scaled)
            rep((H, E, Dh)), rep((H, 1, Dh)),          # Wk, bk
            rep((H, E, Dh)), rep((H, 1, Dh)),          # Wv, bv
            rep((H, Dh, E)), rep((1, E)),              # Wo, bo
        ],
        out_specs=[
            pl.BlockSpec((1, S, E), lambda b: (b, 0, 0)),
            pl.BlockSpec((1, H, S, S_pad), lambda b: (b, 0, 0, 0)),
        ],
        compiler_params=pltpu.CompilerParams(
            dimension_semantics=("parallel",)),
    )(x, prepared['wq'], prepared['bq'], prepared['wk'], prepared['bk'],
      prepared['wv'], prepared['bv'], prepared['wo'], prepared['bo'])

    return out, att_p[..., :S]                  # slice padding back off


# ---------------------------------------------------------------------------
# pure-JAX reference (f32, HIGHEST precision) and deterministic init
# ---------------------------------------------------------------------------
def self_attention_reference(x, p, n_heads):
    B, S, E = x.shape
    H = n_heads
    Dh = E // H
    hi = jax.lax.Precision.HIGHEST

    def proj(w, b):
        y = jnp.dot(x, w, precision=hi) + b
        return y.reshape(B, S, H, Dh).transpose(0, 2, 1, 3)

    q, k, v = proj(p['wq'], p['bq']), proj(p['wk'], p['bk']), proj(p['wv'], p['bv'])
    att = jnp.einsum('bhqd,bhkd->bhqk', q, k, precision=hi) / math.sqrt(Dh)
    att = jax.nn.softmax(att, axis=-1)
    ctx = jnp.einsum('bhqk,bhkd->bhqd', att, v, precision=hi)
    ctx = ctx.transpose(0, 2, 1, 3).reshape(B, S, E)
    out = jnp.dot(ctx, p['wo'], precision=hi) + p['bo']
    return out, att


def init_params(key, *, embed_dim):
    """torch nn.Linear default init: U(-1/sqrt(fan_in), 1/sqrt(fan_in))."""
    E = embed_dim
    lim = 1.0 / math.sqrt(E)
    keys = jax.random.split(key, 8)
    u = lambda kk, shape: jax.random.uniform(kk, shape, jnp.float32, -lim, lim)
    return {
        'wq': u(keys[0], (E, E)), 'bq': u(keys[1], (E,)),
        'wk': u(keys[2], (E, E)), 'bk': u(keys[3], (E,)),
        'wv': u(keys[4], (E, E)), 'bv': u(keys[5], (E,)),
        'wo': u(keys[6], (E, E)), 'bo': u(keys[7], (E,)),
    }


# ---------------------------------------------------------------------------
if __name__ == "__main__":
    B, S, E, H = 2, 8, 32, 4

    key = jax.random.PRNGKey(0)
    kx, kp = jax.random.split(key)
    params = init_params(kp, embed_dim=E)
    x = jax.random.normal(kx, (B, S, E), jnp.float32)

    prepared = prepare_params(params, H)
    fwd = jax.jit(functools.partial(self_attention_forward, n_heads=H))
    out, att = fwd(x, prepared)
    jax.block_until_ready((out, att))

    out_ref, att_ref = self_attention_reference(x, params, H)

    assert out.shape == (B, S, E), out.shape
    assert att.shape == (B, H, S, S), att.shape
    assert bool(jnp.all(jnp.isfinite(out))) and bool(jnp.all(jnp.isfinite(att)))
    # bf16 MXU inputs + approx reciprocal -> compare with mixed-precision tolerance
    assert bool(jnp.allclose(att, att_ref, atol=5e-3, rtol=5e-2)), \
        float(jnp.max(jnp.abs(att - att_ref)))
    assert bool(jnp.allclose(out, out_ref, atol=2e-2, rtol=2e-2)), \
        float(jnp.max(jnp.abs(out - out_ref)))
    print("KERNEL_OK")
</pallas_src>

<mosaic_0001>
module attributes {stable_mosaic.version = 11 : i64} {
  func.func @_self_attention_kernel(%arg0: i32, %arg1: memref<1x8x32xf32, #tpu.memory_space<vmem>>, %arg2: memref<4x32x8xbf16, #tpu.memory_space<vmem>>, %arg3: memref<4x1x8xf32, #tpu.memory_space<vmem>>, %arg4: memref<4x32x8xbf16, #tpu.memory_space<vmem>>, %arg5: memref<4x1x8xf32, #tpu.memory_space<vmem>>, %arg6: memref<4x32x8xbf16, #tpu.memory_space<vmem>>, %arg7: memref<4x1x8xf32, #tpu.memory_space<vmem>>, %arg8: memref<4x8x32xbf16, #tpu.memory_space<vmem>>, %arg9: memref<1x32xf32, #tpu.memory_space<vmem>>, %arg10: memref<1x8x32xf32, #tpu.memory_space<vmem>>, %arg11: memref<1x4x8x128xf32, #tpu.memory_space<vmem>>) attributes {dimension_semantics = [#tpu.dimension_semantics<parallel>], iteration_bounds = array<i64: 2>, scalar_prefetch = 0 : i64, scratch_operands = 0 : i64, tpu.core_type = #tpu.core_type<tc>, window_params = [{transform_indices = @transform_0, window_bounds = array<i64: 1, 8, 32>}, {pipeline_mode = #tpu.pipeline_mode<synchronous>, transform_indices = @transform_1, window_bounds = array<i64: 4, 32, 8>}, {pipeline_mode = #tpu.pipeline_mode<synchronous>, transform_indices = @transform_2, window_bounds = array<i64: 4, 1, 8>}, {pipeline_mode = #tpu.pipeline_mode<synchronous>, transform_indices = @transform_3, window_bounds = array<i64: 4, 32, 8>}, {pipeline_mode = #tpu.pipeline_mode<synchronous>, transform_indices = @transform_4, window_bounds = array<i64: 4, 1, 8>}, {pipeline_mode = #tpu.pipeline_mode<synchronous>, transform_indices = @transform_5, window_bounds = array<i64: 4, 32, 8>}, {pipeline_mode = #tpu.pipeline_mode<synchronous>, transform_indices = @transform_6, window_bounds = array<i64: 4, 1, 8>}, {pipeline_mode = #tpu.pipeline_mode<synchronous>, transform_indices = @transform_7, window_bounds = array<i64: 4, 8, 32>}, {pipeline_mode = #tpu.pipeline_mode<synchronous>, transform_indices = @transform_8, window_bounds = array<i64: 1, 32>}, {transform_indices = @transform_9, window_bounds = array<i64: 1, 8, 32>}, {transform_indices = @transform_10, window_bounds = array<i64: 1, 4, 8, 128>}]} {
    %c0 = arith.constant 0 : index
    %c0_0 = arith.constant 0 : index
    %c0_1 = arith.constant 0 : index
    %0 = vector.load %arg1[%c0, %c0_0, %c0_1] : memref<1x8x32xf32, #tpu.memory_space<vmem>>, vector<1x8x32xf32>
    %1 = vector.shape_cast %0 : vector<1x8x32xf32> to vector<8x32xf32>
    %2 = arith.truncf %1 : vector<8x32xf32> to vector<8x32xbf16>
    %3 = vector.shape_cast %2 : vector<8x32xbf16> to vector<1x8x32xbf16>
    %4 = vector.broadcast %3 : vector<1x8x32xbf16> to vector<4x8x32xbf16>
    %c0_2 = arith.constant 0 : index
    %c0_3 = arith.constant 0 : index
    %c0_4 = arith.constant 0 : index
    %5 = vector.load %arg2[%c0_2, %c0_3, %c0_4] : memref<4x32x8xbf16, #tpu.memory_space<vmem>>, vector<4x32x8xbf16>
    "tpu.trace_start"() <{level = 10 : i32, message = "hse,hed->hsd"}> : () -> ()
    %cst = arith.constant dense<0.000000e+00> : vector<4x8x8xf32>
    %6 = tpu.matmul %4, %5, %cst {dimension_numbers = #tpu.dot_dimension_numbers<[2], [1], [1], [2], [0, 0, 0, 1, 1, 2], [0], [0]>} : vector<4x8x32xbf16>, vector<4x32x8xbf16>, vector<4x8x8xf32> -> vector<4x8x8xf32>
    "tpu.trace_stop"() : () -> ()
    %c0_5 = arith.constant 0 : index
    %c0_6 = arith.constant 0 : index
    %c0_7 = arith.constant 0 : index
    %7 = vector.load %arg3[%c0_5, %c0_6, %c0_7] : memref<4x1x8xf32, #tpu.memory_space<vmem>>, vector<4x1x8xf32>
    %8 = vector.broadcast %7 : vector<4x1x8xf32> to vector<4x8x8xf32>
    %9 = arith.addf %6, %8 : vector<4x8x8xf32>
    %c0_8 = arith.constant 0 : index
    %c0_9 = arith.constant 0 : index
    %c0_10 = arith.constant 0 : index
    %10 = vector.load %arg4[%c0_8, %c0_9, %c0_10] : memref<4x32x8xbf16, #tpu.memory_space<vmem>>, vector<4x32x8xbf16>
    "tpu.trace_start"() <{level = 10 : i32, message = "hse,hed->hsd"}> : () -> ()
    %cst_11 = arith.constant dense<0.000000e+00> : vector<4x8x8xf32>
    %11 = tpu.matmul %4, %10, %cst_11 {dimension_numbers = #tpu.dot_dimension_numbers<[2], [1], [1], [2], [0, 0, 0, 1, 1, 2], [0], [0]>} : vector<4x8x32xbf16>, vector<4x32x8xbf16>, vector<4x8x8xf32> -> vector<4x8x8xf32>
    "tpu.trace_stop"() : () -> ()
    %c0_12 = arith.constant 0 : index
    %c0_13 = arith.constant 0 : index
    %c0_14 = arith.constant 0 : index
    %12 = vector.load %arg5[%c0_12, %c0_13, %c0_14] : memref<4x1x8xf32, #tpu.memory_space<vmem>>, vector<4x1x8xf32>
    %13 = vector.broadcast %12 : vector<4x1x8xf32> to vector<4x8x8xf32>
    %14 = arith.addf %11, %13 : vector<4x8x8xf32>
    %c0_15 = arith.constant 0 : index
    %c0_16 = arith.constant 0 : index
    %c0_17 = arith.constant 0 : index
    %15 = vector.load %arg6[%c0_15, %c0_16, %c0_17] : memref<4x32x8xbf16, #tpu.memory_space<vmem>>, vector<4x32x8xbf16>
    "tpu.trace_start"() <{level = 10 : i32, message = "hse,hed->hsd"}> : () -> ()
    %cst_18 = arith.constant dense<0.000000e+00> : vector<4x8x8xf32>
    %16 = tpu.matmul %4, %15, %cst_18 {dimension_numbers = #tpu.dot_dimension_numbers<[2], [1], [1], [2], [0, 0, 0, 1, 1, 2], [0], [0]>} : vector<4x8x32xbf16>, vector<4x32x8xbf16>, vector<4x8x8xf32> -> vector<4x8x8xf32>
    "tpu.trace_stop"() : () -> ()
    %c0_19 = arith.constant 0 : index
    %c0_20 = arith.constant 0 : index
    %c0_21 = arith.constant 0 : index
    %17 = vector.load %arg7[%c0_19, %c0_20, %c0_21] : memref<4x1x8xf32, #tpu.memory_space<vmem>>, vector<4x1x8xf32>
    %18 = vector.broadcast %17 : vector<4x1x8xf32> to vector<4x8x8xf32>
    %19 = arith.addf %16, %18 : vector<4x8x8xf32>
    %20 = arith.truncf %9 : vector<4x8x8xf32> to vector<4x8x8xbf16>
    %21 = arith.truncf %14 : vector<4x8x8xf32> to vector<4x8x8xbf16>
    "tpu.trace_start"() <{level = 10 : i32, message = "hqd,hkd->hqk"}> : () -> ()
    %cst_22 = arith.constant dense<0.000000e+00> : vector<4x8x8xf32>
    %22 = tpu.matmul %20, %21, %cst_22 {dimension_numbers = #tpu.dot_dimension_numbers<[2], [2], [1], [1], [0, 0, 0, 1, 1, 1], [0], [0]>} : vector<4x8x8xbf16>, vector<4x8x8xbf16>, vector<4x8x8xf32> -> vector<4x8x8xf32>
    %cst_23 = arith.constant -1.000000e+30 : f32
    "tpu.trace_stop"() : () -> ()
    %23 = vector.broadcast %cst_23 : f32 to vector<4x8x120xf32>
    %24 = tpu.concatenate %22, %23 in 2 : vector<4x8x8xf32>, vector<4x8x120xf32> -> vector<4x8x128xf32>
    %cst_24 = arith.constant dense<0xFF800000> : vector<4x8xf32>
    %25 = vector.multi_reduction <maximumf>, %24, %cst_24 [2] : vector<4x8x128xf32> to vector<4x8xf32>
    %26 = vector.shape_cast %25 : vector<4x8xf32> to vector<4x8x1xf32>
    %27 = vector.broadcast %26 : vector<4x8x1xf32> to vector<4x8x128xf32>
    %28 = arith.subf %24, %27 : vector<4x8x128xf32>
    %29 = math.exp %28 : vector<4x8x128xf32>
    %cst_25 = arith.constant dense<0.000000e+00> : vector<4x8xf32>
    %30 = vector.multi_reduction <add>, %29, %cst_25 [2] : vector<4x8x128xf32> to vector<4x8xf32>
    %31 = vector.shape_cast %30 : vector<4x8xf32> to vector<4x8x1xf32>
    %32 = tpu.reciprocal %31 {approx = true} : vector<4x8x1xf32> -> vector<4x8x1xf32>
    %33 = vector.broadcast %32 : vector<4x8x1xf32> to vector<4x8x128xf32>
    %34 = arith.mulf %29, %33 : vector<4x8x128xf32>
    %c0_26 = arith.constant 0 : index
    %c0_27 = arith.constant 0 : index
    %c0_28 = arith.constant 0 : index
    %c0_29 = arith.constant 0 : index
    %35 = vector.load %arg11[%c0_26, %c0_27, %c0_28, %c0_29] : memref<1x4x8x128xf32, #tpu.memory_space<vmem>>, vector<1x4x8x128xf32>
    %36 = vector.shape_cast %35 : vector<1x4x8x128xf32> to vector<4x8x128xf32>
    %37 = vector.shape_cast %34 : vector<4x8x128xf32> to vector<1x4x8x128xf32>
    tpu.vector_store %arg11[%c0_26, %c0_27, %c0_28, %c0_29], %37 {strides = array<i32>} : memref<1x4x8x128xf32, #tpu.memory_space<vmem>>, vector<1x4x8x128xf32>,
    %38 = vector.extract_strided_slice %34 {offsets = [0, 0, 0], sizes = [4, 8, 8], strides = [1, 1, 1]} : vector<4x8x128xf32> to vector<4x8x8xf32>
    %39 = arith.truncf %38 : vector<4x8x8xf32> to vector<4x8x8xbf16>
    %40 = arith.truncf %19 : vector<4x8x8xf32> to vector<4x8x8xbf16>
    "tpu.trace_start"() <{level = 10 : i32, message = "hqk,hkd->hqd"}> : () -> ()
    %cst_30 = arith.constant dense<0.000000e+00> : vector<4x8x8xf32>
    %41 = tpu.matmul %39, %40, %cst_30 {dimension_numbers = #tpu.dot_dimension_numbers<[2], [1], [1], [2], [0, 0, 0, 1, 1, 2], [0], [0]>} : vector<4x8x8xbf16>, vector<4x8x8xbf16>, vector<4x8x8xf32> -> vector<4x8x8xf32>
    "tpu.trace_stop"() : () -> ()
    %42 = arith.truncf %41 : vector<4x8x8xf32> to vector<4x8x8xbf16>
    %c0_31 = arith.constant 0 : index
    %c0_32 = arith.constant 0 : index
    %c0_33 = arith.constant 0 : index
    %43 = vector.load %arg8[%c0_31, %c0_32, %c0_33] : memref<4x8x32xbf16, #tpu.memory_space<vmem>>, vector<4x8x32xbf16>
    "tpu.trace_start"() <{level = 10 : i32, message = "hsd,hde->hse"}> : () -> ()
    %cst_34 = arith.constant dense<0.000000e+00> : vector<4x8x32xf32>
    %44 = tpu.matmul %42, %43, %cst_34 {dimension_numbers = #tpu.dot_dimension_numbers<[2], [1], [1], [2], [0, 0, 0, 1, 1, 2], [0], [0]>} : vector<4x8x8xbf16>, vector<4x8x32xbf16>, vector<4x8x32xf32> -> vector<4x8x32xf32>
    "tpu.trace_stop"() : () -> ()
    %cst_35 = arith.constant dense<0.000000e+00> : vector<8x32xf32>
    %45 = vector.multi_reduction <add>, %44, %cst_35 [0] : vector<4x8x32xf32> to vector<8x32xf32>
    %c0_36 = arith.constant 0 : index
    %c0_37 = arith.constant 0 : index
    %46 = vector.load %arg9[%c0_36, %c0_37] : memref<1x32xf32, #tpu.memory_space<vmem>>, vector<1x32xf32>
    %47 = vector.broadcast %46 : vector<1x32xf32> to vector<8x32xf32>
    %48 = arith.addf %45, %47 : vector<8x32xf32>
    %c0_38 = arith.constant 0 : index
    %c0_39 = arith.constant 0 : index
    %c0_40 = arith.constant 0 : index
    %49 = vector.load %arg10[%c0_38, %c0_39, %c0_40] : memref<1x8x32xf32, #tpu.memory_space<vmem>>, vector<1x8x32xf32>
    %50 = vector.shape_cast %49 : vector<1x8x32xf32> to vector<8x32xf32>
    %51 = vector.shape_cast %48 : vector<8x32xf32> to vector<1x8x32xf32>
    tpu.vector_store %arg10[%c0_38, %c0_39, %c0_40], %51 {strides = array<i32>} : memref<1x8x32xf32, #tpu.memory_space<vmem>>, vector<1x8x32xf32>,
    return
  }
  func.func @transform_0(%arg0: i32) -> (i32, i32, i32) {
    %c0_i32 = arith.constant 0 : i32
    %c0_i32_0 = arith.constant 0 : i32
    %c0_i32_1 = arith.constant 0 : i32
    return %arg0, %c0_i32, %c0_i32_0 : i32, i32, i32
  }
  func.func @transform_1(%arg0: i32) -> (i32, i32, i32) {
    %c0_i32 = arith.constant 0 : i32
    %c0_i32_0 = arith.constant 0 : i32
    %c0_i32_1 = arith.constant 0 : i32
    %c0_i32_2 = arith.constant 0 : i32
    return %c0_i32, %c0_i32_0, %c0_i32_1 : i32, i32, i32
  }
  func.func @transform_2(%arg0: i32) -> (i32, i32, i32) {
    %c0_i32 = arith.constant 0 : i32
    %c0_i32_0 = arith.constant 0 : i32
    %c0_i32_1 = arith.constant 0 : i32
    %c0_i32_2 = arith.constant 0 : i32
    return %c0_i32, %c0_i32_0, %c0_i32_1 : i32, i32, i32
  }
  func.func @transform_3(%arg0: i32) -> (i32, i32, i32) {
    %c0_i32 = arith.constant 0 : i32
    %c0_i32_0 = arith.constant 0 : i32
    %c0_i32_1 = arith.constant 0 : i32
    %c0_i32_2 = arith.constant 0 : i32
    return %c0_i32, %c0_i32_0, %c0_i32_1 : i32, i32, i32
  }
  func.func @transform_4(%arg0: i32) -> (i32, i32, i32) {
    %c0_i32 = arith.constant 0 : i32
    %c0_i32_0 = arith.constant 0 : i32
    %c0_i32_1 = arith.constant 0 : i32
    %c0_i32_2 = arith.constant 0 : i32
    return %c0_i32, %c0_i32_0, %c0_i32_1 : i32, i32, i32
  }
  func.func @transform_5(%arg0: i32) -> (i32, i32, i32) {
    %c0_i32 = arith.constant 0 : i32
    %c0_i32_0 = arith.constant 0 : i32
    %c0_i32_1 = arith.constant 0 : i32
    %c0_i32_2 = arith.constant 0 : i32
    return %c0_i32, %c0_i32_0, %c0_i32_1 : i32, i32, i32
  }
  func.func @transform_6(%arg0: i32) -> (i32, i32, i32) {
    %c0_i32 = arith.constant 0 : i32
    %c0_i32_0 = arith.constant 0 : i32
    %c0_i32_1 = arith.constant 0 : i32
    %c0_i32_2 = arith.constant 0 : i32
    return %c0_i32, %c0_i32_0, %c0_i32_1 : i32, i32, i32
  }
  func.func @transform_7(%arg0: i32) -> (i32, i32, i32) {
    %c0_i32 = arith.constant 0 : i32
    %c0_i32_0 = arith.constant 0 : i32
    %c0_i32_1 = arith.constant 0 : i32
    %c0_i32_2 = arith.constant 0 : i32
    return %c0_i32, %c0_i32_0, %c0_i32_1 : i32, i32, i32
  }
  func.func @transform_8(%arg0: i32) -> (i32, i32) {
    %c0_i32 = arith.constant 0 : i32
    %c0_i32_0 = arith.constant 0 : i32
    %c0_i32_1 = arith.constant 0 : i32
    return %c0_i32, %c0_i32_0 : i32, i32
  }
  func.func @transform_9(%arg0: i32) -> (i32, i32, i32) {
    %c0_i32 = arith.constant 0 : i32
    %c0_i32_0 = arith.constant 0 : i32
    %c0_i32_1 = arith.constant 0 : i32
    return %arg0, %c0_i32, %c0_i32_0 : i32, i32, i32
  }
  func.func @transform_10(%arg0: i32) -> (i32, i32, i32, i32) {
    %c0_i32 = arith.constant 0 : i32
    %c0_i32_0 = arith.constant 0 : i32
    %c0_i32_1 = arith.constant 0 : i32
    %c0_i32_2 = arith.constant 0 : i32
    return %arg0, %c0_i32, %c0_i32_0, %c0_i32_1 : i32, i32, i32, i32
  }
}

</mosaic_0001>

<llo_original>
// kernel: self_attention_forward.1
$region0: #{self_attention_forward.1}
  #allocation0 [shape = 'u32[]', space=smem, size = 0x4, offset = 0x4, fixed_abs, tag = 'smem constant byte address 0x4 - core index']
  #allocation1 [shape = 'u32[72,128]{1,0:T(1,128)}', space=vmem, size = 0x9000, scoped, tag = 'internal scratch']
  %s0 = inlined_call_operand.vmem [shape: f32[2,8,32], index: 0, kind: input, shape index: {}]
  %s1 = inlined_call_operand.vmem [shape: bf16[4,32,8], index: 1, kind: input, shape index: {}]
  %s2 = inlined_call_operand.vmem [shape: f32[4,1,8], index: 2, kind: input, shape index: {}]
  %s3 = inlined_call_operand.vmem [shape: bf16[4,32,8], index: 3, kind: input, shape index: {}]
  %s4 = inlined_call_operand.vmem [shape: f32[4,1,8], index: 4, kind: input, shape index: {}]
  %s5 = inlined_call_operand.vmem [shape: bf16[4,32,8], index: 5, kind: input, shape index: {}]
  %s6 = inlined_call_operand.vmem [shape: f32[4,1,8], index: 6, kind: input, shape index: {}]
  %s7 = inlined_call_operand.vmem [shape: bf16[4,8,32], index: 7, kind: input, shape index: {}]
  %s8 = inlined_call_operand.vmem [shape: f32[1,32], index: 8, kind: input, shape index: {}]
  %s9 = inlined_call_operand.hbm [shape: f32[2,8,32], index: 9, kind: output, shape index: {0}]
  %s10 = inlined_call_operand.hbm [shape: f32[2,4,8,128], index: 10, kind: output, shape index: {1}]
  %11 = xla_tuple %s9, %s10
  %s12 = sld [smem:[#allocation0]]
  $region77: #{self_attention_forward.1} parent=0
    _
  %s14 = ssub.s32 1, %s12
  %s15 = scalar_select 0, %s14, %s12
  $region1: #{self_attention_forward.1} parent=0
    #allocation2 [shape = 'u8[8192]{0}', space=vmem, size = 0x2000, scoped, tag = 'output window, operand 0']
    #allocation3 [shape = 's32[2]{0}', space=sflag, size = 0x8, scoped, tag = 'scoped memory for self_attention_forward.1']
    #allocation4 [shape = 'u8[32768]{0}', space=vmem, size = 0x8000, scoped, tag = 'output window, operand 1']
    #allocation5 [shape = 's32[2]{0}', space=sflag, size = 0x8, scoped, tag = 'scoped memory for self_attention_forward.1']
    %16 = vsyncpa [#allocation3], 0
    %s17 = scalar_lea.sflag [#allocation3], 1
    %18 = vsyncpa %s17, 0
    %19 = vsyncpa [#allocation5], 0
    %s20 = scalar_lea.sflag [#allocation5], 1
    %21 = vsyncpa %s20, 0
    loop: start=0, step=1, limit=4
    $region2: #{self_attention_forward.1} parent=1 // loop_pre_header
      _
    $region3: #{self_attention_forward.1} parent=1 // loop_header
      %s23 = sphi 0, %s27
      %p24 = scmp.ge.s32.totalorder %s23, 4
      %s33 = sphi 0, %s35
      %s36 = sphi 0, %s33
      %s37 = sphi 0, %s36
      %s53 = sphi 0, %s37
      %s57 = sphi 0, %s57
      %s59 = sphi 0, %s57
      %s60 = sphi 0, %s59
      %s74 = sphi 0, %s60
      %s78 = sphi 0, %s78
      %s80 = sphi 0, %s78
      %s81 = sphi 0, %s80
      %s95 = sphi 0, %s81
      %s99 = sphi 0, %s99
      %s101 = sphi 0, %s99
      %s102 = sphi 0, %s101
      %s116 = sphi 0, %s102
      %s120 = sphi 0, %s120
      %s122 = sphi 0, %s120
      %s123 = sphi 0, %s122
      %s137 = sphi 0, %s123
      %s141 = sphi 0, %s141
      %s143 = sphi 0, %s141
      %s144 = sphi 0, %s143
      %s158 = sphi 0, %s144
      %s162 = sphi 0, %s162
      %s164 = sphi 0, %s162
      %s165 = sphi 0, %s164
      %s179 = sphi 0, %s165
      %s183 = sphi 0, %s183
      %s185 = sphi 0, %s183
      %s186 = sphi 0, %s185
      %s200 = sphi 0, %s186
      %s204 = sphi 0, %s204
      %s206 = sphi 0, %s204
      %s207 = sphi 0, %s206
      %s221 = sphi 0, %s207
      %s227 = sphi 0, %s229
      %s230 = sphi 0, %s227
      %s231 = sphi 0, %s230
      %s247 = sphi 0, %s231
      %s253 = sphi 0, %s255
      %s256 = sphi 0, %s253
      %s257 = sphi 0, %s256
      %s273 = sphi 0, %s257
    $region4: #{self_attention_forward.1} parent=1 // loop_header_branch
      %26 = sbr.rel (%p24) target = $region8
    $region5: #{self_attention_forward.1} parent=1 // loop_body
      %s28 = ssub.s32 %s23, 1
      %s29 = ssub.s32 %s23, 2
      %s30 = sadd.s32 %s23, 1
      %s31 = ssub.s32 %s23, %s30
      %p32 = scmp.eq.s32.totalorder %s31, 0
      %s34 = sadd.s32 %s33, 1
      %s35 = scalar_select %p32, %s33, %s34
      %p38 = pneg %p32
      %p39 = scmp.eq.s32.totalorder %s23, 1
      %p40 = por %p38, %p39
      %p41 = scmp.ne.s32.totalorder %s33, %s36
      %p42 = scmp.eq.s32.totalorder %s23, 0
      %p43 = por %p41, %p42
      %p44 = scmp.ne.s32.totalorder %s33, %s36
      %p45 = scmp.eq.s32.totalorder %s28, 1
      %p46 = por %p44, %p45
      %p47 = scmp.ne.s32.totalorder %s36, %s37
      %p48 = scmp.eq.s32.totalorder %s28, 0
      %p49 = por %p47, %p48
      %p50 = scmp.ne.s32.totalorder %s36, %s37
      %p51 = scmp.eq.s32.totalorder %s29, 1
      %p52 = por %p50, %p51
      %p54 = scmp.ne.s32.totalorder %s37, %s53
      %p55 = scmp.eq.s32.totalorder %s29, 0
      %p56 = por %p54, %p55
      %s58 = sadd.s32 %s57, 1
      %p61 = scmp.eq.s32.totalorder %s23, 1
      %p62 = scmp.ne.s32.totalorder %s57, %s59
      %p63 = scmp.eq.s32.totalorder %s23, 0
      %p64 = por %p62, %p63
      %p65 = scmp.ne.s32.totalorder %s57, %s59
      %p66 = scmp.eq.s32.totalorder %s28, 1
      %p67 = por %p65, %p66
      %p68 = scmp.ne.s32.totalorder %s59, %s60
      %p69 = scmp.eq.s32.totalorder %s28, 0
      %p70 = por %p68, %p69
      %p71 = scmp.ne.s32.totalorder %s59, %s60
      %p72 = scmp.eq.s32.totalorder %s29, 1
      %p73 = por %p71, %p72
      %p75 = scmp.ne.s32.totalorder %s60, %s74
      %p76 = scmp.eq.s32.totalorder %s29, 0
      %p77 = por %p75, %p76
      %s79 = sadd.s32 %s78, 1
      %p82 = scmp.eq.s32.totalorder %s23, 1
      %p83 = scmp.ne.s32.totalorder %s78, %s80
      %p84 = scmp.eq.s32.totalorder %s23, 0
      %p85 = por %p83, %p84
      %p86 = scmp.ne.s32.totalorder %s78, %s80
      %p87 = scmp.eq.s32.totalorder %s28, 1
      %p88 = por %p86, %p87
      %p89 = scmp.ne.s32.totalorder %s80, %s81
      %p90 = scmp.eq.s32.totalorder %s28, 0
      %p91 = por %p89, %p90
      %p92 = scmp.ne.s32.totalorder %s80, %s81
      %p93 = scmp.eq.s32.totalorder %s29, 1
      %p94 = por %p92, %p93
      %p96 = scmp.ne.s32.totalorder %s81, %s95
      %p97 = scmp.eq.s32.totalorder %s29, 0
      %p98 = por %p96, %p97
      %s100 = sadd.s32 %s99, 1
      %p103 = scmp.eq.s32.totalorder %s23, 1
      %p104 = scmp.ne.s32.totalorder %s99, %s101
      %p105 = scmp.eq.s32.totalorder %s23, 0
      %p106 = por %p104, %p105
      %p107 = scmp.ne.s32.totalorder %s99, %s101
      %p108 = scmp.eq.s32.totalorder %s28, 1
      %p109 = por %p107, %p108
      %p110 = scmp.ne.s32.totalorder %s101, %s102
      %p111 = scmp.eq.s32.totalorder %s28, 0
      %p112 = por %p110, %p111
      %p113 = scmp.ne.s32.totalorder %s101, %s102
      %p114 = scmp.eq.s32.totalorder %s29, 1
      %p115 = por %p113, %p114
      %p117 = scmp.ne.s32.totalorder %s102, %s116
      %p118 = scmp.eq.s32.totalorder %s29, 0
      %p119 = por %p117, %p118
      %s121 = sadd.s32 %s120, 1
      %p124 = scmp.eq.s32.totalorder %s23, 1
      %p125 = scmp.ne.s32.totalorder %s120, %s122
      %p126 = scmp.eq.s32.totalorder %s23, 0
      %p127 = por %p125, %p126
      %p128 = scmp.ne.s32.totalorder %s120, %s122
      %p129 = scmp.eq.s32.totalorder %s28, 1
      %p130 = por %p128, %p129
      %p131 = scmp.ne.s32.totalorder %s122, %s123
      %p132 = scmp.eq.s32.totalorder %s28, 0
      %p133 = por %p131, %p132
      %p134 = scmp.ne.s32.totalorder %s122, %s123
      %p135 = scmp.eq.s32.totalorder %s29, 1
      %p136 = por %p134, %p135
      %p138 = scmp.ne.s32.totalorder %s123, %s137
      %p139 = scmp.eq.s32.totalorder %s29, 0
      %p140 = por %p138, %p139
      %s142 = sadd.s32 %s141, 1
      %p145 = scmp.eq.s32.totalorder %s23, 1
      %p146 = scmp.ne.s32.totalorder %s141, %s143
      %p147 = scmp.eq.s32.totalorder %s23, 0
      %p148 = por %p146, %p147
      %p149 = scmp.ne.s32.totalorder %s141, %s143
      %p150 = scmp.eq.s32.totalorder %s28, 1
      %p151 = por %p149, %p150
      %p152 = scmp.ne.s32.totalorder %s143, %s144
      %p153 = scmp.eq.s32.totalorder %s28, 0
      %p154 = por %p152, %p153
      %p155 = scmp.ne.s32.totalorder %s143, %s144
      %p156 = scmp.eq.s32.totalorder %s29, 1
      %p157 = por %p155, %p156
      %p159 = scmp.ne.s32.totalorder %s144, %s158
      %p160 = scmp.eq.s32.totalorder %s29, 0
      %p161 = por %p159, %p160
      %s163 = sadd.s32 %s162, 1
      %p166 = scmp.eq.s32.totalorder %s23, 1
      %p167 = scmp.ne.s32.totalorder %s162, %s164
      %p168 = scmp.eq.s32.totalorder %s23, 0
      %p169 = por %p167, %p168
      %p170 = scmp.ne.s32.totalorder %s162, %s164
      %p171 = scmp.eq.s32.totalorder %s28, 1
      %p172 = por %p170, %p171
      %p173 = scmp.ne.s32.totalorder %s164, %s165
      %p174 = scmp.eq.s32.totalorder %s28, 0
      %p175 = por %p173, %p174
      %p176 = scmp.ne.s32.totalorder %s164, %s165
      %p177 = scmp.eq.s32.totalorder %s29, 1
      %p178 = por %p176, %p177
      %p180 = scmp.ne.s32.totalorder %s165, %s179
      %p181 = scmp.eq.s32.totalorder %s29, 0
      %p182 = por %p180, %p181
      %s184 = sadd.s32 %s183, 1
      %p187 = scmp.eq.s32.totalorder %s23, 1
      %p188 = scmp.ne.s32.totalorder %s183, %s185
      %p189 = scmp.eq.s32.totalorder %s23, 0
      %p190 = por %p188, %p189
      %p191 = scmp.ne.s32.totalorder %s183, %s185
      %p192 = scmp.eq.s32.totalorder %s28, 1
      %p193 = por %p191, %p192
      %p194 = scmp.ne.s32.totalorder %s185, %s186
      %p195 = scmp.eq.s32.totalorder %s28, 0
      %p196 = por %p194, %p195
      %p197 = scmp.ne.s32.totalorder %s185, %s186
      %p198 = scmp.eq.s32.totalorder %s29, 1
      %p199 = por %p197, %p198
      %p201 = scmp.ne.s32.totalorder %s186, %s200
      %p202 = scmp.eq.s32.totalorder %s29, 0
      %p203 = por %p201, %p202
      %s205 = sadd.s32 %s204, 1
      %p208 = scmp.eq.s32.totalorder %s23, 1
      %p209 = scmp.ne.s32.totalorder %s204, %s206
      %p210 = scmp.eq.s32.totalorder %s23, 0
      %p211 = por %p209, %p210
      %p212 = scmp.ne.s32.totalorder %s204, %s206
      %p213 = scmp.eq.s32.totalorder %s28, 1
      %p214 = por %p212, %p213
      %p215 = scmp.ne.s32.totalorder %s206, %s207
      %p216 = scmp.eq.s32.totalorder %s28, 0
      %p217 = por %p215, %p216
      %p218 = scmp.ne.s32.totalorder %s206, %s207
      %p219 = scmp.eq.s32.totalorder %s29, 1
      %p220 = por %p218, %p219
      %p222 = scmp.ne.s32.totalorder %s207, %s221
      %p223 = scmp.eq.s32.totalorder %s29, 0
      %p224 = por %p222, %p223
      %s225 = ssub.s32 %s23, %s30
      %p226 = scmp.eq.s32.totalorder %s225, 0
      %s228 = sadd.s32 %s227, 1
      %s229 = scalar_select %p226, %s227, %s228
      %p232 = pneg %p226
      %p233 = scmp.eq.s32.totalorder %s23, 1
      %p234 = por %p232, %p233
      %p235 = scmp.ne.s32.totalorder %s227, %s230
      %p236 = scmp.eq.s32.totalorder %s23, 0
      %p237 = por %p235, %p236
      %p238 = scmp.ne.s32.totalorder %s227, %s230
      %p239 = scmp.eq.s32.totalorder %s28, 1
      %p240 = por %p238, %p239
      %p241 = scmp.ne.s32.totalorder %s230, %s231
      %p242 = scmp.eq.s32.totalorder %s28, 0
      %p243 = por %p241, %p242
      %p244 = scmp.ne.s32.totalorder %s230, %s231
      %p245 = scmp.eq.s32.totalorder %s29, 1
      %p246 = por %p244, %p245
      %p248 = scmp.ne.s32.totalorder %s231, %s247
      %p249 = scmp.eq.s32.totalorder %s29, 0
      %p250 = por %p248, %p249
      %s251 = ssub.s32 %s23, %s30
      %p252 = scmp.eq.s32.totalorder %s251, 0
      %s254 = sadd.s32 %s253, 1
      %s255 = scalar_select %p252, %s253, %s254
      %p258 = pneg %p252
      %p259 = scmp.eq.s32.totalorder %s23, 1
      %p260 = por %p258, %p259
      %p261 = scmp.ne.s32.totalorder %s253, %s256
      %p262 = scmp.eq.s32.totalorder %s23, 0
      %p263 = por %p261, %p262
      %p264 = scmp.ne.s32.totalorder %s253, %s256
      %p265 = scmp.eq.s32.totalorder %s28, 1
      %p266 = por %p264, %p265
      %p267 = scmp.ne.s32.totalorder %s256, %s257
      %p268 = scmp.eq.s32.totalorder %s28, 0
      %p269 = por %p267, %p268
      %p270 = scmp.ne.s32.totalorder %s256, %s257
      %p271 = scmp.eq.s32.totalorder %s29, 1
      %p272 = por %p270, %p271
      %p274 = scmp.ne.s32.totalorder %s257, %s273
      %p275 = scmp.eq.s32.totalorder %s29, 0
      %p276 = por %p274, %p275
      %p277 = scmp.le.s32.totalorder 1, %s23
      %p278 = scmp.lt.s32.totalorder %s23, 3
      %p279 = pnand %p277, %p278
      %p280 = pneg %p279
      // Predicated region
      $region9: #{self_attention_forward.1} parent=5 // pred_check
        _
      $region10: #{self_attention_forward.1} parent=5 // pred_check_branch
        %282 = sbr.rel (%p279) target = $region12
      $region11: #{self_attention_forward.1} parent=5 // pred_region
        %s283 = ssub.s32 %s23, 1
        // Predicated region
        $region13: #{self_attention_forward.1} parent=11 // pred_check
          %p284 = pneg %p70
        $region14: #{self_attention_forward.1} parent=11 // pred_check_branch
          %286 = sbr.rel (%p284) target = $region16
        $region15: #{self_attention_forward.1} parent=11 // pred_region
          _
        $region16: #{self_attention_forward.1} parent=11 // pred_fallthru
          _
        // Predicated region
        $region17: #{self_attention_forward.1} parent=11 // pred_check
          %p287 = pneg %p91
        $region18: #{self_attention_forward.1} parent=11 // pred_check_branch
          %289 = sbr.rel (%p287) target = $region20
        $region19: #{self_attention_forward.1} parent=11 // pred_region
          _
        $region20: #{self_attention_forward.1} parent=11 // pred_fallthru
          _
        // Predicated region
        $region21: #{self_attention_forward.1} parent=11 // pred_check
          %p290 = pneg %p112
        $region22: #{self_attention_forward.1} parent=11 // pred_check_branch
          %292 = sbr.rel (%p290) target = $region24
        $region23: #{self_attention_forward.1} parent=11 // pred_region
          _
        $region24: #{self_attention_forward.1} parent=11 // pred_fallthru
          _
        // Predicated region
        $region25: #{self_attention_forward.1} parent=11 // pred_check
          %p293 = pneg %p133
        $region26: #{self_attention_forward.1} parent=11 // pred_check_branch
          %295 = sbr.rel (%p293) target = $region28
        $region27: #{self_attention_forward.1} parent=11 // pred_region
          _
        $region28: #{self_attention_forward.1} parent=11 // pred_fallthru
          _
        // Predicated region
        $region29: #{self_attention_forward.1} parent=11 // pred_check
          %p296 = pneg %p154
        $region30: #{self_attention_forward.1} parent=11 // pred_check_branch
          %298 = sbr.rel (%p296) target = $region32
        $region31: #{self_attention_forward.1} parent=11 // pred_region
          _
        $region32: #{self_attention_forward.1} parent=11 // pred_fallthru
          _
        // Predicated region
        $region33: #{self_attention_forward.1} parent=11 // pred_check
          %p299 = pneg %p175
        $region34: #{self_attention_forward.1} parent=11 // pred_check_branch
          %301 = sbr.rel (%p299) target = $region36
        $region35: #{self_attention_forward.1} parent=11 // pred_region
          _
        $region36: #{self_attention_forward.1} parent=11 // pred_fallthru
          _
        // Predicated region
        $region37: #{self_attention_forward.1} parent=11 // pred_check
          %p302 = pneg %p196
        $region38: #{self_attention_forward.1} parent=11 // pred_check_branch
          %304 = sbr.rel (%p302) target = $region40
        $region39: #{self_attention_forward.1} parent=11 // pred_region
          _
        $region40: #{self_attention_forward.1} parent=11 // pred_fallthru
          _
        // Predicated region
        $region41: #{self_attention_forward.1} parent=11 // pred_check
          %p305 = pneg %p217
        $region42: #{self_attention_forward.1} parent=11 // pred_check_branch
          %307 = sbr.rel (%p305) target = $region44
        $region43: #{self_attention_forward.1} parent=11 // pred_region
          _
        $region44: #{self_attention_forward.1} parent=11 // pred_fallthru
          _
      $region12: #{self_attention_forward.1} parent=5 // pred_fallthru
        _
      %p308 = scmp.lt.s32.totalorder %s23, 2
      // Predicated region
      $region45: #{self_attention_forward.1} parent=5 // pred_check
        %p309 = pneg %p308
      $region46: #{self_attention_forward.1} parent=5 // pred_check_branch
        %311 = sbr.rel (%p309) target = $region48
      $region47: #{self_attention_forward.1} parent=5 // pred_region
        // Predicated region
        $region49: #{self_attention_forward.1} parent=47 // pred_check
          %p312 = pneg %p43
        $region50: #{self_attention_forward.1} parent=47 // pred_check_branch
          %314 = sbr.rel (%p312) target = $region52
        $region51: #{self_attention_forward.1} parent=47 // pred_region
          %p315 = scmp.lt.s32.totalorder %s23, 1
          %s316 = scalar_select %p315, %s23, 1
          %s317 = smul.addr %s316, 8
          %s318 = scalar_lea.vmem %s0, %s317
        $region52: #{self_attention_forward.1} parent=47 // pred_fallthru
          _
      $region48: #{self_attention_forward.1} parent=5 // pred_fallthru
        _
      %p319 = scmp.le.s32.totalorder 1, %s23
      %p320 = scmp.lt.s32.totalorder %s23, 3
      %p321 = pnand %p319, %p320
      %p322 = pneg %p321
      // Predicated region
      $region53: #{self_attention_forward.1} parent=5 // pred_check
        _
      $region54: #{self_attention_forward.1} parent=5 // pred_check_branch
        %324 = sbr.rel (%p321) target = $region56
      $region55: #{self_attention_forward.1} parent=5 // pred_region
        %s325 = ssub.s32 %s23, 1
        %p326 = scmp.lt.s32.totalorder %s28, 1
        %s327 = scalar_select %p326, %s28, 1
        %s328 = smul.addr %s327, 8
        %s329 = scalar_lea.vmem %s0, %s328
        %p330 = pneg %p49
        %p331 = pneg %p46
        %p332 = pneg %p70
        %p333 = pneg %p67
        %p334 = pneg %p91
        %p335 = pneg %p88
        %p336 = pneg %p112
        %p337 = pneg %p109
        %p338 = pneg %p133
        %p339 = pneg %p130
        %p340 = pneg %p154
        %p341 = pneg %p151
        %p342 = pneg %p175
        %p343 = pneg %p172
        %p344 = pneg %p196
        %p345 = pneg %p193
        %p346 = pneg %p217
        %p347 = pneg %p214
        %p348 = pneg %p243
        %p349 = pneg %p240
        %s350 = sand.u32 %s230, 1
        %s351 = scalar_lea.sflag [#allocation3], %s350
        %s352 = sand.u32 %s230, 1
        %s353 = smul.addr %s352, 8
        %s354 = scalar_lea.vmem [#allocation2], %s353
        %p355 = pneg %p269
        %p356 = pneg %p266
        %s357 = sand.u32 %s256, 1
        %s358 = scalar_lea.sflag [#allocation5], %s357
        %s359 = sand.u32 %s256, 1
        %s360 = smul.addr %s359, 32
        %s361 = scalar_lea.vmem [#allocation4], %s360
        %p362 = scmp.lt.s32.totalorder %s28, 1
        %s363 = scalar_select %p362, %s28, 1
        %s364 = smul.addr %s363, 8
        %s365 = scalar_lea.vmem %s0, %s364
        %v367 = vld [vmem:[%s365] sm:$0xff]
        %v368 = vpack.c.bf16 %v367, %v367
        %v369 = vld [vmem:[%s1] sm:$0xf]
        %v370 = vld [vmem:[%s1 + $0x4] sm:$0xf]
        %v371 = vld [vmem:[%s1 + $0x8] sm:$0xf]
        %v372 = vld [vmem:[%s1 + $0xc] sm:$0xf]
        %v373 = vld [vmem:[%s1 + $0x10] sm:$0xf]
        %v374 = vld [vmem:[%s1 + $0x14] sm:$0xf]
        %v375 = vld [vmem:[%s1 + $0x18] sm:$0xf]
        %v376 = vld [vmem:[%s1 + $0x1c] sm:$0xf]
        %v377 = vld [vmem:[%s1 + $0x20] sm:$0xf]
        %v378 = vld [vmem:[%s1 + $0x24] sm:$0xf]
        %v379 = vld [vmem:[%s1 + $0x28] sm:$0xf]
        %v380 = vld [vmem:[%s1 + $0x2c] sm:$0xf]
        %v381 = vld [vmem:[%s1 + $0x30] sm:$0xf]
        %v382 = vld [vmem:[%s1 + $0x34] sm:$0xf]
        %v383 = vld [vmem:[%s1 + $0x38] sm:$0xf]
        %v384 = vld [vmem:[%s1 + $0x3c] sm:$0xf]
        %v385 = vld [vmem:[%s2] sm:$0x1]
        %v386 = vld [vmem:[%s2 + $0x1] sm:$0x1]
        %v387 = vld [vmem:[%s2 + $0x2] sm:$0x1]
        %v388 = vld [vmem:[%s2 + $0x3] sm:$0x1]
        %v393 = vperm.slane %v385, 0
        %v394 = vperm.slane %v386, 0
        %v395 = vperm.slane %v387, 0
        %v396 = vperm.slane %v388, 0
        %v405 = vunpack.c.l.b16 %v369
        %v406 = vunpack.c.l.b16 %v370
        %v407 = vunpack.c.l.b16 %v371
        %v408 = vunpack.c.l.b16 %v372
        %v409 = vpack.c.b16 %v406, %v405
        %v410 = vpack.c.b16 %v408, %v407
        %vm413 = vcmask 261120
        %v415 = vsel %vm413, %v368, 0
        %417 = vmatpush.bf16.msra.mxu0 0
        %418 = vmatpush.bf16.msra.mxu0 0
        %419 = vmatpush.bf16.msra.mxu0 0
        %420 = vmatpush.bf16.msra.mxu0 0
        %421 = vmatpush.bf16.msra.mxu0 0
        %422 = vmatpush.bf16.msra.mxu0 0
        %423 = vmatpush.bf16.msra.mxu0 %v410
        %424 = vmatpush.bf16.msra.mxu0 %v409
        %425 = vmatmul.bf16.gmra.mxu0 %v415
        %v426 = vpop.f32.mrf.mxu0
        %v427 = vadd.f32 %v393, %v426
        %v428 = vpop.f32.mrf.mxu0
        %429 = vdwg.mxu0
        %v434 = vunpack.c.l.b16 %v373
        %v435 = vunpack.c.l.b16 %v374
        %v436 = vunpack.c.l.b16 %v375
        %v437 = vunpack.c.l.b16 %v376
        %v438 = vpack.c.b16 %v435, %v434
        %v439 = vpack.c.b16 %v437, %v436
        %442 = vmatpush.bf16.msra.mxu0 0
        %443 = vmatpush.bf16.msra.mxu0 0
        %444 = vmatpush.bf16.msra.mxu0 0
        %445 = vmatpush.bf16.msra.mxu0 0
        %446 = vmatpush.bf16.msra.mxu0 0
        %447 = vmatpush.bf16.msra.mxu0 0
        %448 = vmatpush.bf16.msra.mxu0 %v439
        %449 = vmatpush.bf16.msra.mxu0 %v438
        %450 = vmatmul.bf16.gmra.mxu0 %v415
        %v451 = vpop.f32.mrf.mxu0
        %v452 = vadd.f32 %v394, %v451
        %v453 = vpop.f32.mrf.mxu0
        %454 = vdwg.mxu0
        %v459 = vunpack.c.l.b16 %v377
        %v460 = vunpack.c.l.b16 %v378
        %v461 = vunpack.c.l.b16 %v379
        %v462 = vunpack.c.l.b16 %v380
        %v463 = vpack.c.b16 %v460, %v459
        %v464 = vpack.c.b16 %v462, %v461
        %467 = vmatpush.bf16.msra.mxu0 0
        %468 = vmatpush.bf16.msra.mxu0 0
        %469 = vmatpush.bf16.msra.mxu0 0
        %470 = vmatpush.bf16.msra.mxu0 0
        %471 = vmatpush.bf16.msra.mxu0 0
        %472 = vmatpush.bf16.msra.mxu0 0
        %473 = vmatpush.bf16.msra.mxu0 %v464
        %474 = vmatpush.bf16.msra.mxu0 %v463
        %475 = vmatmul.bf16.gmra.mxu0 %v415
        %v476 = vpop.f32.mrf.mxu0
        %v477 = vadd.f32 %v395, %v476
        %v478 = vpop.f32.mrf.mxu0
        %479 = vdwg.mxu0
        %v484 = vunpack.c.l.b16 %v381
        %v485 = vunpack.c.l.b16 %v382
        %v486 = vunpack.c.l.b16 %v383
        %v487 = vunpack.c.l.b16 %v384
        %v488 = vpack.c.b16 %v485, %v484
        %v489 = vpack.c.b16 %v487, %v486
        %492 = vmatpush.bf16.msra.mxu0 0
        %493 = vmatpush.bf16.msra.mxu0 0
        %494 = vmatpush.bf16.msra.mxu0 0
        %495 = vmatpush.bf16.msra.mxu0 0
        %496 = vmatpush.bf16.msra.mxu0 0
        %497 = vmatpush.bf16.msra.mxu0 0
        %498 = vmatpush.bf16.msra.mxu0 %v489
        %499 = vmatpush.bf16.msra.mxu0 %v488
        %500 = vmatmul.bf16.gmra.mxu0 %v415
        %v501 = vpop.f32.mrf.mxu0
        %v502 = vadd.f32 %v396, %v501
        %v503 = vpop.f32.mrf.mxu0
        %504 = vdwg.mxu0
        %v505 = vld [vmem:[%s3] sm:$0xf]
        %v506 = vld [vmem:[%s3 + $0x4] sm:$0xf]
        %v507 = vld [vmem:[%s3 + $0x8] sm:$0xf]
        %v508 = vld [vmem:[%s3 + $0xc] sm:$0xf]
        %v509 = vld [vmem:[%s3 + $0x10] sm:$0xf]
        %v510 = vld [vmem:[%s3 + $0x14] sm:$0xf]
        %v511 = vld [vmem:[%s3 + $0x18] sm:$0xf]
        %v512 = vld [vmem:[%s3 + $0x1c] sm:$0xf]
        %v513 = vld [vmem:[%s3 + $0x20] sm:$0xf]
        %v514 = vld [vmem:[%s3 + $0x24] sm:$0xf]
        %v515 = vld [vmem:[%s3 + $0x28] sm:$0xf]
        %v516 = vld [vmem:[%s3 + $0x2c] sm:$0xf]
        %v517 = vld [vmem:[%s3 + $0x30] sm:$0xf]
        %v518 = vld [vmem:[%s3 + $0x34] sm:$0xf]
        %v519 = vld [vmem:[%s3 + $0x38] sm:$0xf]
        %v520 = vld [vmem:[%s3 + $0x3c] sm:$0xf]
        %v521 = vld [vmem:[%s4] sm:$0x1]
        %v522 = vld [vmem:[%s4 + $0x1] sm:$0x1]
        %v523 = vld [vmem:[%s4 + $0x2] sm:$0x1]
        %v524 = vld [vmem:[%s4 + $0x3] sm:$0x1]
        %v529 = vperm.slane %v521, 0
        %v530 = vperm.slane %v522, 0
        %v531 = vperm.slane %v523, 0
        %v532 = vperm.slane %v524, 0
        %v541 = vunpack.c.l.b16 %v505
        %v542 = vunpack.c.l.b16 %v506
        %v543 = vunpack.c.l.b16 %v507
        %v544 = vunpack.c.l.b16 %v508
        %v545 = vpack.c.b16 %v542, %v541
        %v546 = vpack.c.b16 %v544, %v543
        %549 = vmatpush.bf16.msra.mxu0 0
        %550 = vmatpush.bf16.msra.mxu0 0
        %551 = vmatpush.bf16.msra.mxu0 0
        %552 = vmatpush.bf16.msra.mxu0 0
        %553 = vmatpush.bf16.msra.mxu0 0
        %554 = vmatpush.bf16.msra.mxu0 0
        %555 = vmatpush.bf16.msra.mxu0 %v546
        %556 = vmatpush.bf16.msra.mxu0 %v545
        %557 = vmatmul.bf16.gmra.mxu0 %v415
        %v558 = vpop.f32.mrf.mxu0
        %v559 = vadd.f32 %v529, %v558
        %v560 = vpop.f32.mrf.mxu0
        %561 = vdwg.mxu0
        %v566 = vunpack.c.l.b16 %v509
        %v567 = vunpack.c.l.b16 %v510
        %v568 = vunpack.c.l.b16 %v511
        %v569 = vunpack.c.l.b16 %v512
        %v570 = vpack.c.b16 %v567, %v566
        %v571 = vpack.c.b16 %v569, %v568
        %574 = vmatpush.bf16.msra.mxu0 0
        %575 = vmatpush.bf16.msra.mxu0 0
        %576 = vmatpush.bf16.msra.mxu0 0
        %577 = vmatpush.bf16.msra.mxu0 0
        %578 = vmatpush.bf16.msra.mxu0 0
        %579 = vmatpush.bf16.msra.mxu0 0
        %580 = vmatpush.bf16.msra.mxu0 %v571
        %581 = vmatpush.bf16.msra.mxu0 %v570
        %582 = vmatmul.bf16.gmra.mxu0 %v415
        %v583 = vpop.f32.mrf.mxu0
        %v584 = vadd.f32 %v530, %v583
        %v585 = vpop.f32.mrf.mxu0
        %586 = vdwg.mxu0
        %v591 = vunpack.c.l.b16 %v513
        %v592 = vunpack.c.l.b16 %v514
        %v593 = vunpack.c.l.b16 %v515
        %v594 = vunpack.c.l.b16 %v516
        %v595 = vpack.c.b16 %v592, %v591
        %v596 = vpack.c.b16 %v594, %v593
        %599 = vmatpush.bf16.msra.mxu0 0
        %600 = vmatpush.bf16.msra.mxu0 0
        %601 = vmatpush.bf16.msra.mxu0 0
        %602 = vmatpush.bf16.msra.mxu0 0
        %603 = vmatpush.bf16.msra.mxu0 0
        %604 = vmatpush.bf16.msra.mxu0 0
        %605 = vmatpush.bf16.msra.mxu0 %v596
        %606 = vmatpush.bf16.msra.mxu0 %v595
        %607 = vmatmul.bf16.gmra.mxu0 %v415
        %v608 = vpop.f32.mrf.mxu0
        %v609 = vadd.f32 %v531, %v608
        %v610 = vpop.f32.mrf.mxu0
        %611 = vdwg.mxu0
        %v616 = vunpack.c.l.b16 %v517
        %v617 = vunpack.c.l.b16 %v518
        %v618 = vunpack.c.l.b16 %v519
        %v619 = vunpack.c.l.b16 %v520
        %v620 = vpack.c.b16 %v617, %v616
        %v621 = vpack.c.b16 %v619, %v618
        %624 = vmatpush.bf16.msra.mxu0 0
        %625 = vmatpush.bf16.msra.mxu0 0
        %626 = vmatpush.bf16.msra.mxu0 0
        %627 = vmatpush.bf16.msra.mxu0 0
        %628 = vmatpush.bf16.msra.mxu0 0
        %629 = vmatpush.bf16.msra.mxu0 0
        %630 = vmatpush.bf16.msra.mxu0 %v621
        %631 = vmatpush.bf16.msra.mxu0 %v620
        %632 = vmatmul.bf16.gmra.mxu0 %v415
        %v633 = vpop.f32.mrf.mxu0
        %v634 = vadd.f32 %v532, %v633
        %v635 = vpop.f32.mrf.mxu0
        %636 = vdwg.mxu0
        %v637 = vld [vmem:[%s5] sm:$0xf]
        %v638 = vld [vmem:[%s5 + $0x4] sm:$0xf]
        %v639 = vld [vmem:[%s5 + $0x8] sm:$0xf]
        %v640 = vld [vmem:[%s5 + $0xc] sm:$0xf]
        %v641 = vld [vmem:[%s5 + $0x10] sm:$0xf]
        %v642 = vld [vmem:[%s5 + $0x14] sm:$0xf]
        %v643 = vld [vmem:[%s5 + $0x18] sm:$0xf]
        %v644 = vld [vmem:[%s5 + $0x1c] sm:$0xf]
        %v645 = vld [vmem:[%s5 + $0x20] sm:$0xf]
        %v646 = vld [vmem:[%s5 + $0x24] sm:$0xf]
        %v647 = vld [vmem:[%s5 + $0x28] sm:$0xf]
        %v648 = vld [vmem:[%s5 + $0x2c] sm:$0xf]
        %v649 = vld [vmem:[%s5 + $0x30] sm:$0xf]
        %v650 = vld [vmem:[%s5 + $0x34] sm:$0xf]
        %v651 = vld [vmem:[%s5 + $0x38] sm:$0xf]
        %v652 = vld [vmem:[%s5 + $0x3c] sm:$0xf]
        %v653 = vld [vmem:[%s6] sm:$0x1]
        %v654 = vld [vmem:[%s6 + $0x1] sm:$0x1]
        %v655 = vld [vmem:[%s6 + $0x2] sm:$0x1]
        %v656 = vld [vmem:[%s6 + $0x3] sm:$0x1]
        %v661 = vperm.slane %v653, 0
        %v662 = vperm.slane %v654, 0
        %v663 = vperm.slane %v655, 0
        %v664 = vperm.slane %v656, 0
        %v673 = vunpack.c.l.b16 %v637
        %v674 = vunpack.c.l.b16 %v638
        %v675 = vunpack.c.l.b16 %v639
        %v676 = vunpack.c.l.b16 %v640
        %v677 = vpack.c.b16 %v674, %v673
        %v678 = vpack.c.b16 %v676, %v675
        %681 = vmatpush.bf16.msra.mxu0 0
        %682 = vmatpush.bf16.msra.mxu0 0
        %683 = vmatpush.bf16.msra.mxu0 0
        %684 = vmatpush.bf16.msra.mxu0 0
        %685 = vmatpush.bf16.msra.mxu0 0
        %686 = vmatpush.bf16.msra.mxu0 0
        %687 = vmatpush.bf16.msra.mxu0 %v678
        %688 = vmatpush.bf16.msra.mxu0 %v677
        %689 = vmatmul.bf16.gmra.mxu0 %v415
        %v690 = vpop.f32.mrf.mxu0
        %v691 = vadd.f32 %v661, %v690
        %v692 = vpop.f32.mrf.mxu0
        %693 = vdwg.mxu0
        %v698 = vunpack.c.l.b16 %v641
        %v699 = vunpack.c.l.b16 %v642
        %v700 = vunpack.c.l.b16 %v643
        %v701 = vunpack.c.l.b16 %v644
        %v702 = vpack.c.b16 %v699, %v698
        %v703 = vpack.c.b16 %v701, %v700
        %706 = vmatpush.bf16.msra.mxu0 0
        %707 = vmatpush.bf16.msra.mxu0 0
        %708 = vmatpush.bf16.msra.mxu0 0
        %709 = vmatpush.bf16.msra.mxu0 0
        %710 = vmatpush.bf16.msra.mxu0 0
        %711 = vmatpush.bf16.msra.mxu0 0
        %712 = vmatpush.bf16.msra.mxu0 %v703
        %713 = vmatpush.bf16.msra.mxu0 %v702
        %714 = vmatmul.bf16.gmra.mxu0 %v415
        %v715 = vpop.f32.mrf.mxu0
        %v716 = vadd.f32 %v662, %v715
        %v717 = vpop.f32.mrf.mxu0
        %718 = vdwg.mxu0
        %v723 = vunpack.c.l.b16 %v645
        %v724 = vunpack.c.l.b16 %v646
        %v725 = vunpack.c.l.b16 %v647
        %v726 = vunpack.c.l.b16 %v648
        %v727 = vpack.c.b16 %v724, %v723
        %v728 = vpack.c.b16 %v726, %v725
        %731 = vmatpush.bf16.msra.mxu0 0
        %732 = vmatpush.bf16.msra.mxu0 0
        %733 = vmatpush.bf16.msra.mxu0 0
        %734 = vmatpush.bf16.msra.mxu0 0
        %735 = vmatpush.bf16.msra.mxu0 0
        %736 = vmatpush.bf16.msra.mxu0 0
        %737 = vmatpush.bf16.msra.mxu0 %v728
        %738 = vmatpush.bf16.msra.mxu0 %v727
        %739 = vmatmul.bf16.gmra.mxu0 %v415
        %v740 = vpop.f32.mrf.mxu0
        %v741 = vadd.f32 %v663, %v740
        %v742 = vpop.f32.mrf.mxu0
        %743 = vdwg.mxu0
        %v748 = vunpack.c.l.b16 %v649
        %v749 = vunpack.c.l.b16 %v650
        %v750 = vunpack.c.l.b16 %v651
        %v751 = vunpack.c.l.b16 %v652
        %v752 = vpack.c.b16 %v749, %v748
        %v753 = vpack.c.b16 %v751, %v750
        %756 = vmatpush.bf16.msra.mxu0 0
        %757 = vmatpush.bf16.msra.mxu0 0
        %758 = vmatpush.bf16.msra.mxu0 0
        %759 = vmatpush.bf16.msra.mxu0 0
        %760 = vmatpush.bf16.msra.mxu0 0
        %761 = vmatpush.bf16.msra.mxu0 0
        %762 = vmatpush.bf16.msra.mxu0 %v753
        %763 = vmatpush.bf16.msra.mxu0 %v752
        %764 = vmatmul.bf16.gmra.mxu0 %v415
        %v765 = vpop.f32.mrf.mxu0
        %v766 = vadd.f32 %v664, %v765
        %v767 = vpop.f32.mrf.mxu0
        %768 = vdwg.mxu0
        %v769 = vpack.c.bf16 %v427, %v427
        %v770 = vpack.c.bf16 %v452, %v452
        %v771 = vpack.c.bf16 %v477, %v477
        %v772 = vpack.c.bf16 %v502, %v502
        %v773 = vpack.c.bf16 %v559, %v559
        %v774 = vpack.c.bf16 %v584, %v584
        %v775 = vpack.c.bf16 %v609, %v609
        %v776 = vpack.c.bf16 %v634, %v634
        %vm777 = vcmask 64512
        %v779 = vsel %vm777, %v769, 0
        %v782 = vsel %vm777, %v773, 0
        %784 = vmatpush.bf16.xpose.msra.mxu0 0
        %785 = vmatpush.bf16.xpose.msra.mxu0 0
        %786 = vmatpush.bf16.xpose.msra.mxu0 0
        %787 = vmatpush.bf16.xpose.msra.mxu0 0
        %788 = vmatpush.bf16.xpose.msra.mxu0 0
        %789 = vmatpush.bf16.xpose.msra.mxu0 0
        %790 = vmatpush.bf16.xpose.msra.mxu0 0
        %791 = vmatpush.bf16.xpose.msra.mxu0 %v782
        %792 = vmatmul.bf16.gmra.mxu0 %v779
        %v793 = vpop.f32.mrf.mxu0
        %v794 = vadd.f32 0.0, %v793
        %v795 = vpop.f32.mrf.mxu0
        %796 = vdwg.mxu0
        %v798 = vsel %vm777, %v770, 0
        %v801 = vsel %vm777, %v774, 0
        %803 = vmatpush.bf16.xpose.msra.mxu0 0
        %804 = vmatpush.bf16.xpose.msra.mxu0 0
        %805 = vmatpush.bf16.xpose.msra.mxu0 0
        %806 = vmatpush.bf16.xpose.msra.mxu0 0
        %807 = vmatpush.bf16.xpose.msra.mxu0 0
        %808 = vmatpush.bf16.xpose.msra.mxu0 0
        %809 = vmatpush.bf16.xpose.msra.mxu0 0
        %810 = vmatpush.bf16.xpose.msra.mxu0 %v801
        %811 = vmatmul.bf16.gmra.mxu0 %v798
        %v812 = vpop.f32.mrf.mxu0
        %v813 = vadd.f32 0.0, %v812
        %v814 = vpop.f32.mrf.mxu0
        %815 = vdwg.mxu0
        %v817 = vsel %vm777, %v771, 0
        %v820 = vsel %vm777, %v775, 0
        %822 = vmatpush.bf16.xpose.msra.mxu0 0
        %823 = vmatpush.bf16.xpose.msra.mxu0 0
        %824 = vmatpush.bf16.xpose.msra.mxu0 0
        %825 = vmatpush.bf16.xpose.msra.mxu0 0
        %826 = vmatpush.bf16.xpose.msra.mxu0 0
        %827 = vmatpush.bf16.xpose.msra.mxu0 0
        %828 = vmatpush.bf16.xpose.msra.mxu0 0
        %829 = vmatpush.bf16.xpose.msra.mxu0 %v820
        %830 = vmatmul.bf16.gmra.mxu0 %v817
        %v831 = vpop.f32.mrf.mxu0
        %v832 = vadd.f32 0.0, %v831
        %v833 = vpop.f32.mrf.mxu0
        %834 = vdwg.mxu0
        %v836 = vsel %vm777, %v772, 0
        %v839 = vsel %vm777, %v776, 0
        %841 = vmatpush.bf16.xpose.msra.mxu0 0
        %842 = vmatpush.bf16.xpose.msra.mxu0 0
        %843 = vmatpush.bf16.xpose.msra.mxu0 0
        %844 = vmatpush.bf16.xpose.msra.mxu0 0
        %845 = vmatpush.bf16.xpose.msra.mxu0 0
        %846 = vmatpush.bf16.xpose.msra.mxu0 0
        %847 = vmatpush.bf16.xpose.msra.mxu0 0
        %848 = vmatpush.bf16.xpose.msra.mxu0 %v839
        %849 = vmatmul.bf16.gmra.mxu0 %v836
        %v850 = vpop.f32.mrf.mxu0
        %v851 = vadd.f32 0.0, %v850
        %v852 = vpop.f32.mrf.mxu0
        %853 = vdwg.mxu0
        %v854 = vsel %vm777, %v794, -1e+30
        %v855 = vsel %vm777, %v813, -1e+30
        %v856 = vsel %vm777, %v832, -1e+30
        %v857 = vsel %vm777, %v851, -1e+30
        %858 = vmax.xlane.f32.xlu0 %v854
        %v859 = vpop.xlane.xlu0 %858
        %860 = vmax.xlane.f32.xlu0 %v855
        %v861 = vpop.xlane.xlu0 %860
        %862 = vmax.xlane.f32.xlu0 %v856
        %v863 = vpop.xlane.xlu0 %862
        %864 = vmax.xlane.f32.xlu0 %v857
        %v865 = vpop.xlane.xlu0 %864
        %v866 = vsub.f32 %v854, %v859
        %v867 = vsub.f32 %v855, %v861
        %v868 = vsub.f32 %v856, %v863
        %v869 = vsub.f32 %v857, %v865
        %v870 = vmul.f32 %v866, 1.442695
        %v871 = vpow.pop %v870
        %v872 = vmul.f32 %v867, 1.442695
        %v873 = vpow.pop %v872
        %v874 = vmul.f32 %v868, 1.442695
        %v875 = vpow.pop %v874
        %v876 = vmul.f32 %v869, 1.442695
        %v877 = vpow.pop %v876
        %878 = vadd.xlane.f32.xlu0 %v871
        %v879 = vpop.xlane.xlu0 %878
        %880 = vadd.xlane.f32.xlu0 %v873
        %v881 = vpop.xlane.xlu0 %880
        %882 = vadd.xlane.f32.xlu0 %v875
        %v883 = vpop.xlane.xlu0 %882
        %884 = vadd.xlane.f32.xlu0 %v877
        %v885 = vpop.xlane.xlu0 %884
        %v886 = vrcp.pop %v879
        %v887 = vrcp.pop %v881
        %v888 = vrcp.pop %v883
        %v889 = vrcp.pop %v885
        %v890 = vmul.f32 %v871, %v886
        %v891 = vmul.f32 %v873, %v887
        %v892 = vmul.f32 %v875, %v888
        %v893 = vmul.f32 %v877, %v889
        %894 = vst [vmem:[%s361] sm:$0xff] %v890
        %895 = vst [vmem:[%s361 + $0x8] sm:$0xff] %v891
        %896 = vst [vmem:[%s361 + $0x10] sm:$0xff] %v892
        %897 = vst [vmem:[%s361 + $0x18] sm:$0xff] %v893
        %v898 = vpack.c.bf16 %v890, %v890
        %v899 = vpack.c.bf16 %v891, %v891
        %v900 = vpack.c.bf16 %v892, %v892
        %v901 = vpack.c.bf16 %v893, %v893
        %v902 = vpack.c.bf16 %v691, %v691
        %v903 = vpack.c.bf16 %v716, %v716
        %v904 = vpack.c.bf16 %v741, %v741
        %v905 = vpack.c.bf16 %v766, %v766
        %v907 = vsel %vm777, %v898, 0
        %vm909 = vcmask 1043456
        %v911 = vsel %vm909, %v902, 0
        %913 = vmatpush.bf16.msra.mxu0 0
        %914 = vmatpush.bf16.msra.mxu0 0
        %915 = vmatpush.bf16.msra.mxu0 0
        %916 = vmatpush.bf16.msra.mxu0 0
        %917 = vmatpush.bf16.msra.mxu0 0
        %918 = vmatpush.bf16.msra.mxu0 0
        %919 = vmatpush.bf16.msra.mxu0 0
        %920 = vmatpush.bf16.msra.mxu0 %v911
        %921 = vmatmul.bf16.gmra.mxu0 %v907
        %v922 = vpop.f32.mrf.mxu0
        %v923 = vadd.f32 0.0, %v922
        %v924 = vpop.f32.mrf.mxu0
        %925 = vdwg.mxu0
        %v927 = vsel %vm777, %v899, 0
        %v930 = vsel %vm909, %v903, 0
        %932 = vmatpush.bf16.msra.mxu0 0
        %933 = vmatpush.bf16.msra.mxu0 0
        %934 = vmatpush.bf16.msra.mxu0 0
        %935 = vmatpush.bf16.msra.mxu0 0
        %936 = vmatpush.bf16.msra.mxu0 0
        %937 = vmatpush.bf16.msra.mxu0 0
        %938 = vmatpush.bf16.msra.mxu0 0
        %939 = vmatpush.bf16.msra.mxu0 %v930
        %940 = vmatmul.bf16.gmra.mxu0 %v927
        %v941 = vpop.f32.mrf.mxu0
        %v942 = vadd.f32 0.0, %v941
        %v943 = vpop.f32.mrf.mxu0
        %944 = vdwg.mxu0
        %v946 = vsel %vm777, %v900, 0
        %v949 = vsel %vm909, %v904, 0
        %951 = vmatpush.bf16.msra.mxu0 0
        %952 = vmatpush.bf16.msra.mxu0 0
        %953 = vmatpush.bf16.msra.mxu0 0
        %954 = vmatpush.bf16.msra.mxu0 0
        %955 = vmatpush.bf16.msra.mxu0 0
        %956 = vmatpush.bf16.msra.mxu0 0
        %957 = vmatpush.bf16.msra.mxu0 0
        %958 = vmatpush.bf16.msra.mxu0 %v949
        %959 = vmatmul.bf16.gmra.mxu0 %v946
        %v960 = vpop.f32.mrf.mxu0
        %v961 = vadd.f32 0.0, %v960
        %v962 = vpop.f32.mrf.mxu0
        %963 = vdwg.mxu0
        %v965 = vsel %vm777, %v901, 0
        %v968 = vsel %vm909, %v905, 0
        %970 = vmatpush.bf16.msra.mxu0 0
        %971 = vmatpush.bf16.msra.mxu0 0
        %972 = vmatpush.bf16.msra.mxu0 0
        %973 = vmatpush.bf16.msra.mxu0 0
        %974 = vmatpush.bf16.msra.mxu0 0
        %975 = vmatpush.bf16.msra.mxu0 0
        %976 = vmatpush.bf16.msra.mxu0 0
        %977 = vmatpush.bf16.msra.mxu0 %v968
        %978 = vmatmul.bf16.gmra.mxu0 %v965
        %v979 = vpop.f32.mrf.mxu0
        %v980 = vadd.f32 0.0, %v979
        %v981 = vpop.f32.mrf.mxu0
        %982 = vdwg.mxu0
        %v983 = vpack.c.bf16 %v923, %v923
        %v984 = vpack.c.bf16 %v942, %v942
        %v985 = vpack.c.bf16 %v961, %v961
        %v986 = vpack.c.bf16 %v980, %v980
        %v987 = vld [vmem:[%s7] sm:$0xf]
        %v988 = vld [vmem:[%s7 + $0x4] sm:$0xf]
        %v989 = vld [vmem:[%s7 + $0x8] sm:$0xf]
        %v990 = vld [vmem:[%s7 + $0xc] sm:$0xf]
        %v992 = vsel %vm777, %v983, 0
        %v995 = vsel %vm909, %v987, 0
        %997 = vmatpush.bf16.msra.mxu0 0
        %998 = vmatpush.bf16.msra.mxu0 0
        %999 = vmatpush.bf16.msra.mxu0 0
        %1000 = vmatpush.bf16.msra.mxu0 0
        %1001 = vmatpush.bf16.msra.mxu0 0
        %1002 = vmatpush.bf16.msra.mxu0 0
        %1003 = vmatpush.bf16.msra.mxu0 0
        %1004 = vmatpush.bf16.msra.mxu0 %v995
        %1005 = vmatmul.bf16.gmra.mxu0 %v992
        %v1006 = vpop.f32.mrf.mxu0
        %v1007 = vadd.f32 0.0, %v1006
        %v1008 = vpop.f32.mrf.mxu0
        %1009 = vdwg.mxu0
        %v1011 = vsel %vm777, %v984, 0
        %v1014 = vsel %vm909, %v988, 0
        %1016 = vmatpush.bf16.msra.mxu0 0
        %1017 = vmatpush.bf16.msra.mxu0 0
        %1018 = vmatpush.bf16.msra.mxu0 0
        %1019 = vmatpush.bf16.msra.mxu0 0
        %1020 = vmatpush.bf16.msra.mxu0 0
        %1021 = vmatpush.bf16.msra.mxu0 0
        %1022 = vmatpush.bf16.msra.mxu0 0
        %1023 = vmatpush.bf16.msra.mxu0 %v1014
        %1024 = vmatmul.bf16.gmra.mxu0 %v1011
        %v1025 = vpop.f32.mrf.mxu0
        %v1026 = vadd.f32 0.0, %v1025
        %v1027 = vpop.f32.mrf.mxu0
        %1028 = vdwg.mxu0
        %v1030 = vsel %vm777, %v985, 0
        %v1033 = vsel %vm909, %v989, 0
        %1035 = vmatpush.bf16.msra.mxu0 0
        %1036 = vmatpush.bf16.msra.mxu0 0
        %1037 = vmatpush.bf16.msra.mxu0 0
        %1038 = vmatpush.bf16.msra.mxu0 0
        %1039 = vmatpush.bf16.msra.mxu0 0
        %1040 = vmatpush.bf16.msra.mxu0 0
        %1041 = vmatpush.bf16.msra.mxu0 0
        %1042 = vmatpush.bf16.msra.mxu0 %v1033
        %1043 = vmatmul.bf16.gmra.mxu0 %v1030
        %v1044 = vpop.f32.mrf.mxu0
        %v1045 = vadd.f32 0.0, %v1044
        %v1046 = vpop.f32.mrf.mxu0
        %1047 = vdwg.mxu0
        %v1049 = vsel %vm777, %v986, 0
        %v1052 = vsel %vm909, %v990, 0
        %1054 = vmatpush.bf16.msra.mxu0 0
        %1055 = vmatpush.bf16.msra.mxu0 0
        %1056 = vmatpush.bf16.msra.mxu0 0
        %1057 = vmatpush.bf16.msra.mxu0 0
        %1058 = vmatpush.bf16.msra.mxu0 0
        %1059 = vmatpush.bf16.msra.mxu0 0
        %1060 = vmatpush.bf16.msra.mxu0 0
        %1061 = vmatpush.bf16.msra.mxu0 %v1052
        %1062 = vmatmul.bf16.gmra.mxu0 %v1049
        %v1063 = vpop.f32.mrf.mxu0
        %v1064 = vadd.f32 0.0, %v1063
        %v1065 = vpop.f32.mrf.mxu0
        %1066 = vdwg.mxu0
        %v1067 = vsel %vm413, %v1007, 0.0
        %v1068 = vsel %vm413, %v1026, 0.0
        %v1069 = vadd.f32 %v1067, %v1068
        %v1070 = vsel %vm413, %v1045, 0.0
        %v1071 = vadd.f32 %v1069, %v1070
        %v1072 = vsel %vm413, %v1064, 0.0
        %v1073 = vadd.f32 %v1071, %v1072
        %v1074 = vld [vmem:[%s8] sm:$0x1]
        %v1076 = vperm.slane %v1074, 0
        %v1078 = vadd.f32 %v1073, %v1076
        %1079 = vst.msk [vmem:[%s354] sm:$0xff] %vm413, %v1078
        %s1080 = sand.u32 %s230, 1
        %s1081 = scalar_lea.sflag [#allocation3], %s1080
        %s1082 = sand.u32 %s230, 1
        %s1083 = smul.addr %s1082, 8
        %s1084 = scalar_lea.vmem [#allocation2], %s1083
        %s1085 = sand.u32 %s256, 1
        %s1086 = scalar_lea.sflag [#allocation5], %s1085
        %s1087 = sand.u32 %s256, 1
        %s1088 = smul.addr %s1087, 32
        %s1089 = scalar_lea.vmem [#allocation4], %s1088
        // Predicated region
        $region57: #{self_attention_forward.1} parent=55 // pred_check
          %p1090 = pneg %p240
        $region58: #{self_attention_forward.1} parent=55 // pred_check_branch
          %1092 = sbr.rel (%p1090) target = $region60
        $region59: #{self_attention_forward.1} parent=55 // pred_region
          %1094 = vsyncadd %s1081, 0
          %s1095 = smul.addr %s28, 8
          %s1096 = scalar_lea.hbm %s9, %s1095
          %s1098 = sshll.u32 %s1084, 4
          %s1099 = int_to_ptr.vmem [resolvable:$true] %s1098
          %s1100 = sshll.u32 %s1096, 4
          %s1101 = int_to_ptr.hbm [resolvable:$true] %s1100
          %1103 = dma.vmem_to_hbm [thread:$0]  %s1099, 128, %s1101, %s1081
        $region60: #{self_attention_forward.1} parent=55 // pred_fallthru
          _
        // Predicated region
        $region61: #{self_attention_forward.1} parent=55 // pred_check
          %p1104 = pneg %p266
        $region62: #{self_attention_forward.1} parent=55 // pred_check_branch
          %1106 = sbr.rel (%p1104) target = $region64
        $region63: #{self_attention_forward.1} parent=55 // pred_region
          %1108 = vsyncadd %s1086, 0
          %s1109 = smul.addr %s28, 4
          %s1110 = smul.addr %s1109, 8
          %s1111 = scalar_lea.hbm %s10, %s1110
          %s1112 = sshll.u32 %s1089, 4
          %s1113 = int_to_ptr.vmem [resolvable:$true] %s1112
          %s1114 = sshll.u32 %s1111, 4
          %s1115 = int_to_ptr.hbm [resolvable:$true] %s1114
          %1120 = dma.vmem_to_hbm [thread:$0]  %s1113, 512, %s1115, %s1086, 128, 128, 8
        $region64: #{self_attention_forward.1} parent=55 // pred_fallthru
          _
      $region56: #{self_attention_forward.1} parent=5 // pred_fallthru
        _
      %p1121 = scmp.le.s32.totalorder 2, %s23
      // Predicated region
      $region65: #{self_attention_forward.1} parent=5 // pred_check
        %p1122 = pneg %p1121
      $region66: #{self_attention_forward.1} parent=5 // pred_check_branch
        %1124 = sbr.rel (%p1122) target = $region68
      $region67: #{self_attention_forward.1} parent=5 // pred_region
        %s1125 = ssub.s32 %s23, 2
        // Predicated region
        $region69: #{self_attention_forward.1} parent=67 // pred_check
          %p1126 = pneg %p246
        $region70: #{self_attention_forward.1} parent=67 // pred_check_branch
          %1128 = sbr.rel (%p1126) target = $region72
        $region71: #{self_attention_forward.1} parent=67 // pred_region
          %s1129 = sand.u32 %s231, 1
          %s1130 = scalar_lea.sflag [#allocation3], %s1129
          %s1131 = sand.u32 %s231, 1
          %s1132 = smul.addr %s1131, 8
          %s1133 = scalar_lea.vmem [#allocation2], %s1132
          %1135 = dma.done %s1130, 128
        $region72: #{self_attention_forward.1} parent=67 // pred_fallthru
          _
        // Predicated region
        $region73: #{self_attention_forward.1} parent=67 // pred_check
          %p1136 = pneg %p272
        $region74: #{self_attention_forward.1} parent=67 // pred_check_branch
          %1138 = sbr.rel (%p1136) target = $region76
        $region75: #{self_attention_forward.1} parent=67 // pred_region
          %s1139 = sand.u32 %s257, 1
          %s1140 = scalar_lea.sflag [#allocation5], %s1139
          %s1141 = sand.u32 %s257, 1
          %s1142 = smul.addr %s1141, 32
          %s1143 = scalar_lea.vmem [#allocation4], %s1142
          %1145 = dma.done %s1140, 512
        $region76: #{self_attention_forward.1} parent=67 // pred_fallthru
          _
      $region68: #{self_attention_forward.1} parent=5 // pred_fallthru
        _
    $region6: #{self_attention_forward.1} parent=1 // loop_footer
      %s27 = sadd.s32 1, %s23
    $region7: #{self_attention_forward.1} parent=1 // loop_footer_branch
      %22 = sbr.rel target = $region3
    $region8: #{self_attention_forward.1} parent=1 // loop_exit
      _
    %1146 = vsyncpa [#allocation3], 1
    %s1147 = scalar_lea.sflag [#allocation3], 1
    %1148 = vsyncpa %s1147, 1
    %1149 = vsyncpa [#allocation5], 1
    %s1150 = scalar_lea.sflag [#allocation5], 1
    %1151 = vsyncpa %s1150, 1

</llo_original>
